<compile_context>
chip_gen: v7x
topology: tpu7x:2x2x1
jax: 0.10.0
libtpu: 0.0.40
codegen_flags: <defaults>
</compile_context>

<pallas_src>
import jax
import jax.numpy as jnp
from jax.experimental import pallas as pl
from jax.experimental.pallas import tpu as pltpu

EPS = 1e-5
DROPOUT_P = 0.5
KEEP_THRESHOLD = 128        # keep iff uint8 byte < 128  ->  P(keep) = 0.5 exactly
INV_KEEP = 1.0 / (1.0 - DROPOUT_P)


def _round_up(x, m):
    return (x + m - 1) // m * m


def dense_block_kernel(x_ref, w_ref, gamma_ref, beta_ref, bits_ref, o_ref, acc_ref):
    k = pl.program_id(1)

    @pl.when(k == 0)
    def _():
        acc_ref[...] = jnp.zeros_like(acc_ref)

    # Partial matmul: bf16 operands on the MXU, f32 accumulation in VMEM scratch.
    acc_ref[...] += jnp.dot(x_ref[...], w_ref[...],
                            preferred_element_type=jnp.float32)

    @pl.when(k == pl.num_programs(1) - 1)
    def _():
        y = acc_ref[...]
        # BatchNorm1d training-mode batch statistics (biased variance).
        # The batch axis is never tiled, so y.shape[0] is the full batch B
        # (this invariant must hold if the grid is ever restructured).
        inv_b = 1.0 / y.shape[0]
        mean = jnp.sum(y, axis=0, keepdims=True) * inv_b
        centered = y - mean
        var = jnp.sum(centered * centered, axis=0, keepdims=True) * inv_b
        scale = gamma_ref[...] * jax.lax.rsqrt(var + EPS)        # (1, tn)
        y = centered * scale + beta_ref[...]                     # BN affine
        y = jnp.maximum(y, 0.0)                                  # ReLU
        # Inverted dropout: cheap integer-threshold mask from uint8 bytes.
        keep = bits_ref[...].astype(jnp.int32) < KEEP_THRESHOLD
        o_ref[...] = jnp.where(keep, y * INV_KEEP, 0.0).astype(o_ref.dtype)


def dense_block(x, w_t, gamma, beta, dropout_bits, *, tn=256, tk=512):
    """x: (B, Din) f32/bf16, w_t: (Din, Dout) = Linear weight transposed,
    gamma/beta: (1, Dout) f32, dropout_bits: (B, Dout) uint8."""
    B, Din = x.shape
    Dout = w_t.shape[1]
    assert w_t.shape[0] == Din
    assert dropout_bits.shape == (B, Dout) and dropout_bits.dtype == jnp.uint8

    # N (output-feature) tiling: lane-dense, MXU-width aligned; shrink for tiny Dout.
    tn_eff = min(tn, _round_up(Dout, 128))
    dout_p = _round_up(Dout, tn_eff)

    # K (input-feature) tiling.  Avoid padding x (it is the big HBM stream):
    if Din % tk == 0:
        tk_eff, din_p = tk, Din                  # clean K tiles, no x pad
    elif Din <= tk:
        tk_eff, din_p = Din, Din                 # single K step, no x pad
    else:
        # Rare: large Din not a multiple of tk -> pad (extra HBM pass over x).
        tk_eff, din_p = tk, _round_up(Din, tk)
    n_j = dout_p // tn_eff
    n_k = din_p // tk_eff

    # bf16 MXU operands (f32 accumulation inside the kernel).
    x_p = x.astype(jnp.bfloat16)
    if din_p != Din:
        x_p = jnp.pad(x_p, ((0, 0), (0, din_p - Din)))
    w_p = jnp.pad(w_t.astype(jnp.bfloat16),
                  ((0, din_p - Din), (0, dout_p - Dout)))
    g_p = jnp.pad(gamma.astype(jnp.float32), ((0, 0), (0, dout_p - Dout)),
                  constant_values=1.0)
    b_p = jnp.pad(beta.astype(jnp.float32), ((0, 0), (0, dout_p - Dout)))
    bits_p = jnp.pad(dropout_bits, ((0, 0), (0, dout_p - Dout)))

    cost = pl.CostEstimate(
        flops=2 * B * din_p * dout_p,
        transcendentals=0,
        bytes_accessed=(B * din_p * 2 * n_j        # x (re-streamed per N tile)
                        + din_p * dout_p * 2       # W
                        + B * dout_p               # dropout bytes
                        + 2 * dout_p * 4           # gamma, beta
                        + B * dout_p * 4),         # output
    )

    out = pl.pallas_call(
        dense_block_kernel,
        out_shape=jax.ShapeDtypeStruct((B, dout_p), jnp.float32),
        grid=(n_j, n_k),                               # reduction (K) innermost
        in_specs=[
            pl.BlockSpec((B, tk_eff), lambda j, k: (0, k)),        # x K-slab
            pl.BlockSpec((tk_eff, tn_eff), lambda j, k: (k, j)),   # W^T tile
            pl.BlockSpec((1, tn_eff), lambda j, k: (0, j)),        # gamma tile
            pl.BlockSpec((1, tn_eff), lambda j, k: (0, j)),        # beta tile
            pl.BlockSpec((B, tn_eff), lambda j, k: (0, j)),        # dropout bytes
        ],
        out_specs=pl.BlockSpec((B, tn_eff), lambda j, k: (0, j)),
        scratch_shapes=[pltpu.VMEM((B, tn_eff), jnp.float32)],     # f32 accumulator
        compiler_params=pltpu.CompilerParams(
            dimension_semantics=("parallel", "arbitrary"),
        ),
        cost_estimate=cost,
    )(x_p, w_p, g_p, b_p, bits_p)
    return out[:, :Dout]


if __name__ == "__main__":
    # Small shapes consistent with the module: batch=8, in_features=32, out_features=64.
    B, Din, Dout = 8, 32, 64

    key = jax.random.PRNGKey(0)
    kx, kw, kg, kb, kd = jax.random.split(key, 5)

    x = jax.random.normal(kx, (B, Din), dtype=jnp.float32)
    # nn.Linear weight is (Dout, Din); the kernel takes its transpose (Din, Dout).
    w = jax.random.normal(kw, (Dout, Din), dtype=jnp.float32) * (1.0 / jnp.sqrt(Din))
    w_t = jnp.transpose(w)                                    # (Din, Dout)
    gamma = 1.0 + 0.1 * jax.random.normal(kg, (1, Dout), dtype=jnp.float32)
    beta = 0.1 * jax.random.normal(kb, (1, Dout), dtype=jnp.float32)
    # Dropout random bytes (host-side stream; PyTorch's RNG is not reproducible anyway).
    dropout_bits = jax.random.bits(kd, (B, Dout), dtype=jnp.uint8)

    out = dense_block(x, w_t, gamma, beta, dropout_bits)
    jax.block_until_ready(out)

    # ---- Reference (same bf16 matmul operands / f32 accumulation as the kernel) ----
    y_ref = jnp.dot(x.astype(jnp.bfloat16), w_t.astype(jnp.bfloat16),
                    preferred_element_type=jnp.float32)
    m = y_ref.mean(0, keepdims=True)
    c = y_ref - m
    v = (c * c).mean(0, keepdims=True)
    y_ref = c * (gamma * jax.lax.rsqrt(v + EPS)) + beta
    y_ref = jnp.maximum(y_ref, 0.0)
    keep_ref = dropout_bits.astype(jnp.int32) < KEEP_THRESHOLD
    ref = jnp.where(keep_ref, y_ref * INV_KEEP, 0.0)

    assert out.shape == (B, Dout)
    max_err = float(jnp.max(jnp.abs(out - ref)))
    assert max_err < 5e-3, f"kernel mismatch vs reference (max_err={max_err})"

    print("KERNEL_OK")
</pallas_src>

<mosaic_0001>
module attributes {stable_mosaic.version = 11 : i64} {
  func.func @dense_block_kernel(%arg0: i32, %arg1: i32, %arg2: memref<8x32xbf16, #tpu.memory_space<vmem>>, %arg3: memref<32x128xbf16, #tpu.memory_space<vmem>>, %arg4: memref<1x128xf32, #tpu.memory_space<vmem>>, %arg5: memref<1x128xf32, #tpu.memory_space<vmem>>, %arg6: memref<8x128xi8, #tpu.memory_space<vmem>>, %arg7: memref<8x128xf32, #tpu.memory_space<vmem>>, %arg8: memref<8x128xf32, #tpu.memory_space<vmem>>) attributes {dimension_semantics = [#tpu.dimension_semantics<parallel>, #tpu.dimension_semantics<arbitrary>], iteration_bounds = array<i64: 1, 1>, scalar_prefetch = 0 : i64, scratch_operands = 1 : i64, tpu.core_type = #tpu.core_type<tc>, window_params = [{transform_indices = @transform_0, window_bounds = array<i64: 8, 32>}, {transform_indices = @transform_1, window_bounds = array<i64: 32, 128>}, {transform_indices = @transform_2, window_bounds = array<i64: 1, 128>}, {transform_indices = @transform_3, window_bounds = array<i64: 1, 128>}, {transform_indices = @transform_4, window_bounds = array<i64: 8, 128>}, {transform_indices = @transform_5, window_bounds = array<i64: 8, 128>}]} {
    %c0_i32 = arith.constant 0 : i32
    %0 = arith.cmpi eq, %arg1, %c0_i32 : i32
    %1 = arith.extui %0 : i1 to i32
    %c0_i32_0 = arith.constant 0 : i32
    %2 = arith.cmpi ne, %1, %c0_i32_0 : i32
    scf.if %2 {
      %cst_10 = arith.constant 0.000000e+00 : f32
      %12 = vector.broadcast %cst_10 : f32 to vector<8x128xf32>
      %c0_11 = arith.constant 0 : index
      %c0_12 = arith.constant 0 : index
      %13 = vector.load %arg8[%c0_11, %c0_12] : memref<8x128xf32, #tpu.memory_space<vmem>>, vector<8x128xf32>
      tpu.vector_store %arg8[%c0_11, %c0_12], %12 {strides = array<i32>} : memref<8x128xf32, #tpu.memory_space<vmem>>, vector<8x128xf32>,
    } else {
    }
    %c0 = arith.constant 0 : index
    %c0_1 = arith.constant 0 : index
    %3 = vector.load %arg8[%c0, %c0_1] : memref<8x128xf32, #tpu.memory_space<vmem>>, vector<8x128xf32>
    %c0_2 = arith.constant 0 : index
    %c0_3 = arith.constant 0 : index
    %4 = vector.load %arg2[%c0_2, %c0_3] : memref<8x32xbf16, #tpu.memory_space<vmem>>, vector<8x32xbf16>
    %c0_4 = arith.constant 0 : index
    %c0_5 = arith.constant 0 : index
    %5 = vector.load %arg3[%c0_4, %c0_5] : memref<32x128xbf16, #tpu.memory_space<vmem>>, vector<32x128xbf16>
    %cst = arith.constant dense<0.000000e+00> : vector<8x128xf32>
    %6 = tpu.matmul %4, %5, %cst {dimension_numbers = #tpu.dot_dimension_numbers<[1], [0], [0], [1], [0, 0, 1, 1], [], []>} : vector<8x32xbf16>, vector<32x128xbf16>, vector<8x128xf32> -> vector<8x128xf32>
    %7 = arith.addf %3, %6 : vector<8x128xf32>
    %c0_6 = arith.constant 0 : index
    %c0_7 = arith.constant 0 : index
    %8 = vector.load %arg8[%c0_6, %c0_7] : memref<8x128xf32, #tpu.memory_space<vmem>>, vector<8x128xf32>
    tpu.vector_store %arg8[%c0_6, %c0_7], %7 {strides = array<i32>} : memref<8x128xf32, #tpu.memory_space<vmem>>, vector<8x128xf32>,
    %c0_i32_8 = arith.constant 0 : i32
    %9 = arith.cmpi eq, %arg1, %c0_i32_8 : i32
    %10 = arith.extui %9 : i1 to i32
    %c0_i32_9 = arith.constant 0 : i32
    %11 = arith.cmpi ne, %10, %c0_i32_9 : i32
    scf.if %11 {
      %c0_10 = arith.constant 0 : index
      %c0_11 = arith.constant 0 : index
      %12 = vector.load %arg8[%c0_10, %c0_11] : memref<8x128xf32, #tpu.memory_space<vmem>>, vector<8x128xf32>
      %cst_12 = arith.constant dense<0.000000e+00> : vector<128xf32>
      %13 = vector.multi_reduction <add>, %12, %cst_12 [0] : vector<8x128xf32> to vector<128xf32>
      %14 = vector.shape_cast %13 : vector<128xf32> to vector<1x128xf32>
      %cst_13 = arith.constant 1.250000e-01 : f32
      %15 = vector.broadcast %cst_13 : f32 to vector<1x128xf32>
      %16 = arith.mulf %14, %15 : vector<1x128xf32>
      %17 = vector.broadcast %16 : vector<1x128xf32> to vector<8x128xf32>
      %18 = arith.subf %12, %17 : vector<8x128xf32>
      %19 = arith.mulf %18, %18 : vector<8x128xf32>
      %cst_14 = arith.constant dense<0.000000e+00> : vector<128xf32>
      %20 = vector.multi_reduction <add>, %19, %cst_14 [0] : vector<8x128xf32> to vector<128xf32>
      %21 = vector.shape_cast %20 : vector<128xf32> to vector<1x128xf32>
      %cst_15 = arith.constant 1.250000e-01 : f32
      %22 = vector.broadcast %cst_15 : f32 to vector<1x128xf32>
      %23 = arith.mulf %21, %22 : vector<1x128xf32>
      %c0_16 = arith.constant 0 : index
      %c0_17 = arith.constant 0 : index
      %24 = vector.load %arg4[%c0_16, %c0_17] : memref<1x128xf32, #tpu.memory_space<vmem>>, vector<1x128xf32>
      %cst_18 = arith.constant 9.99999974E-6 : f32
      %25 = vector.broadcast %cst_18 : f32 to vector<1x128xf32>
      %26 = arith.addf %23, %25 : vector<1x128xf32>
      %27 = math.rsqrt %26 : vector<1x128xf32>
      %28 = arith.mulf %24, %27 : vector<1x128xf32>
      %29 = vector.broadcast %28 : vector<1x128xf32> to vector<8x128xf32>
      %30 = arith.mulf %18, %29 : vector<8x128xf32>
      %c0_19 = arith.constant 0 : index
      %c0_20 = arith.constant 0 : index
      %31 = vector.load %arg5[%c0_19, %c0_20] : memref<1x128xf32, #tpu.memory_space<vmem>>, vector<1x128xf32>
      %32 = vector.broadcast %31 : vector<1x128xf32> to vector<8x128xf32>
      %33 = arith.addf %30, %32 : vector<8x128xf32>
      %cst_21 = arith.constant 0.000000e+00 : f32
      %34 = vector.broadcast %cst_21 : f32 to vector<8x128xf32>
      %35 = arith.maximumf %33, %34 : vector<8x128xf32>
      %c0_22 = arith.constant 0 : index
      %c0_23 = arith.constant 0 : index
      %36 = vector.load %arg6[%c0_22, %c0_23] : memref<8x128xi8, #tpu.memory_space<vmem>>, vector<8x128xi8>
      %37 = arith.extui %36 : vector<8x128xi8> to vector<8x128xi32>
      %c128_i32 = arith.constant 128 : i32
      %38 = vector.broadcast %c128_i32 : i32 to vector<8x128xi32>
      %39 = arith.cmpi slt, %37, %38 : vector<8x128xi32>
      %cst_24 = arith.constant 2.000000e+00 : f32
      %40 = vector.broadcast %cst_24 : f32 to vector<8x128xf32>
      %41 = arith.mulf %35, %40 : vector<8x128xf32>
      %cst_25 = arith.constant 0.000000e+00 : f32
      %42 = vector.broadcast %cst_25 : f32 to vector<8x128xf32>
      %43 = arith.select %39, %41, %42 : vector<8x128xi1>, vector<8x128xf32>
      %c0_26 = arith.constant 0 : index
      %c0_27 = arith.constant 0 : index
      %44 = vector.load %arg7[%c0_26, %c0_27] : memref<8x128xf32, #tpu.memory_space<vmem>>, vector<8x128xf32>
      tpu.vector_store %arg7[%c0_26, %c0_27], %43 {strides = array<i32>} : memref<8x128xf32, #tpu.memory_space<vmem>>, vector<8x128xf32>,
    } else {
    }
    return
  }
  func.func @transform_0(%arg0: i32, %arg1: i32) -> (i32, i32) {
    %c0_i32 = arith.constant 0 : i32
    %c0_i32_0 = arith.constant 0 : i32
    return %c0_i32, %arg1 : i32, i32
  }
  func.func @transform_1(%arg0: i32, %arg1: i32) -> (i32, i32) {
    %c0_i32 = arith.constant 0 : i32
    return %arg1, %arg0 : i32, i32
  }
  func.func @transform_2(%arg0: i32, %arg1: i32) -> (i32, i32) {
    %c0_i32 = arith.constant 0 : i32
    %c0_i32_0 = arith.constant 0 : i32
    return %c0_i32, %arg0 : i32, i32
  }
  func.func @transform_3(%arg0: i32, %arg1: i32) -> (i32, i32) {
    %c0_i32 = arith.constant 0 : i32
    %c0_i32_0 = arith.constant 0 : i32
    return %c0_i32, %arg0 : i32, i32
  }
  func.func @transform_4(%arg0: i32, %arg1: i32) -> (i32, i32) {
    %c0_i32 = arith.constant 0 : i32
    %c0_i32_0 = arith.constant 0 : i32
    return %c0_i32, %arg0 : i32, i32
  }
  func.func @transform_5(%arg0: i32, %arg1: i32) -> (i32, i32) {
    %c0_i32 = arith.constant 0 : i32
    %c0_i32_0 = arith.constant 0 : i32
    return %c0_i32, %arg0 : i32, i32
  }
}

</mosaic_0001>

<llo_original>
// kernel: tpu_custom_call.1
$region0: #{tpu_custom_call.1}
  #allocation0 [shape = 'u32[]', space=smem, size = 0x4, offset = 0x4, fixed_abs, tag = 'smem constant byte address 0x4 - core index']
  #allocation1 [shape = 'u32[144,128]{1,0:T(1,128)}', space=vmem, size = 0x12000, scoped, tag = 'internal scratch']
  #allocation2 [shape = 'f32[8,128]{1,0:T(8,128)}', space=vmem, size = 0x1000, scoped, tag = 'scratch operand']
  %s0 = inlined_call_operand.hbm [shape: bf16[8,32], index: 0, kind: input, shape index: {}]
  %s1 = inlined_call_operand.hbm [shape: bf16[32,128], index: 1, kind: input, shape index: {}]
  %s2 = inlined_call_operand.vmem [shape: f32[1,128], index: 2, kind: input, shape index: {}]
  %s3 = inlined_call_operand.vmem [shape: f32[1,128], index: 3, kind: input, shape index: {}]
  %s4 = inlined_call_operand.vmem [shape: u8[8,128], index: 4, kind: input, shape index: {}]
  %s5 = inlined_call_operand.hbm [shape: f32[8,128], index: 5, kind: output, shape index: {}]
  %s6 = sld [smem:[#allocation0]]
  $region46: #{tpu_custom_call.1} parent=0
    _
  %s8 = ssub.s32 1, %s6
  %s9 = scalar_select 0, %s8, %s6
  $region1: #{tpu_custom_call.1} parent=0
    #allocation3 [shape = 'u8[2048]{0}', space=vmem, size = 0x800, scoped, tag = 'input window, operand 0, single buffered']
    #allocation4 [shape = 's32[1]{0}', space=sflag, size = 0x4, scoped, tag = 'scoped memory for tpu_custom_call.1']
    #allocation5 [shape = 's32[1]{0}', space=sflag, size = 0x4, scoped, tag = 'scoped memory for tpu_custom_call.1']
    #allocation6 [shape = 'u8[8192]{0}', space=vmem, size = 0x2000, scoped, tag = 'input window, operand 1, single buffered']
    #allocation7 [shape = 's32[1]{0}', space=sflag, size = 0x4, scoped, tag = 'scoped memory for tpu_custom_call.1']
    #allocation8 [shape = 'u8[4096]{0}', space=vmem, size = 0x1000, scoped, tag = 'output window, operand 0, single buffered']
    %10 = vsyncpa [#allocation4], 0
    %11 = vsyncpa [#allocation7], 0
    %12 = vsyncpa [#allocation5], 0
    // Predicated region
    $region2: #{tpu_custom_call.1} parent=1 // pred_check
      _
    $region3: #{tpu_custom_call.1} parent=1 // pred_check_branch
      %14 = sbr.rel (0) target = $region5
    $region4: #{tpu_custom_call.1} parent=1 // pred_region
      %s16 = ssub.s32 64, 64
      %17 = vsyncadd [#allocation4], %s16
      %s19 = sshll.u32 [#allocation3], 4
      %s20 = int_to_ptr.vmem [resolvable:$true] %s19
      %22 = dma.hbm_to_vmem [thread:$0]  %s0, 64, %s20, [#allocation4]
    $region5: #{tpu_custom_call.1} parent=1 // pred_fallthru
      _
    // Predicated region
    $region6: #{tpu_custom_call.1} parent=1 // pred_check
      _
    $region7: #{tpu_custom_call.1} parent=1 // pred_check_branch
      %24 = sbr.rel (0) target = $region9
    $region8: #{tpu_custom_call.1} parent=1 // pred_region
      %s26 = ssub.s32 256, 256
      %27 = vsyncadd [#allocation7], %s26
      %s28 = sshll.u32 [#allocation6], 4
      %s29 = int_to_ptr.vmem [resolvable:$true] %s28
      %34 = dma.hbm_to_vmem [thread:$0]  %s1, 256, %s29, [#allocation7], 64, 64, 4
    $region9: #{tpu_custom_call.1} parent=1 // pred_fallthru
      _
    // Predicated region
    $region10: #{tpu_custom_call.1} parent=1 // pred_check
      _
    $region11: #{tpu_custom_call.1} parent=1 // pred_check_branch
      %36 = sbr.rel (0) target = $region13
    $region12: #{tpu_custom_call.1} parent=1 // pred_region
      _
    $region13: #{tpu_custom_call.1} parent=1 // pred_fallthru
      _
    // Predicated region
    $region14: #{tpu_custom_call.1} parent=1 // pred_check
      _
    $region15: #{tpu_custom_call.1} parent=1 // pred_check_branch
      %38 = sbr.rel (0) target = $region17
    $region16: #{tpu_custom_call.1} parent=1 // pred_region
      _
    $region17: #{tpu_custom_call.1} parent=1 // pred_fallthru
      _
    // Predicated region
    $region18: #{tpu_custom_call.1} parent=1 // pred_check
      _
    $region19: #{tpu_custom_call.1} parent=1 // pred_check_branch
      %40 = sbr.rel (0) target = $region21
    $region20: #{tpu_custom_call.1} parent=1 // pred_region
      _
    $region21: #{tpu_custom_call.1} parent=1 // pred_fallthru
      _
    // Predicated region
    $region22: #{tpu_custom_call.1} parent=1 // pred_check
      _
    $region23: #{tpu_custom_call.1} parent=1 // pred_check_branch
      %42 = sbr.rel (0) target = $region25
    $region24: #{tpu_custom_call.1} parent=1 // pred_region
      %43 = dma.done [#allocation4], 64
    $region25: #{tpu_custom_call.1} parent=1 // pred_fallthru
      _
    // Predicated region
    $region26: #{tpu_custom_call.1} parent=1 // pred_check
      _
    $region27: #{tpu_custom_call.1} parent=1 // pred_check_branch
      %45 = sbr.rel (0) target = $region29
    $region28: #{tpu_custom_call.1} parent=1 // pred_region
      %46 = dma.done [#allocation7], 256
    $region29: #{tpu_custom_call.1} parent=1 // pred_fallthru
      _
    %p48 = scmp.eq.s32.totalorder 0, 0
    // Predicated region
    $region30: #{tpu_custom_call.1} parent=1 // pred_check
      %p49 = pneg %p48
    $region31: #{tpu_custom_call.1} parent=1 // pred_check_branch
      %51 = sbr.rel (%p49) target = $region33
    $region32: #{tpu_custom_call.1} parent=1 // pred_region
      %52 = vst [vmem:[#allocation2] sm:$0xff] 0.0
    $region33: #{tpu_custom_call.1} parent=1 // pred_fallthru
      _
    %v53 = vld [vmem:[#allocation2] sm:$0xff]
    %v54 = vld [vmem:[#allocation3] sm:$0xf]
    %v55 = vld [vmem:[#allocation6] sm:$0xf]
    %v56 = vld [vmem:[#allocation6 + $0x4] sm:$0xf]
    %v57 = vld [vmem:[#allocation6 + $0x8] sm:$0xf]
    %v58 = vld [vmem:[#allocation6 + $0xc] sm:$0xf]
    %v63 = vunpack.c.l.b16 %v55
    %v64 = vunpack.c.l.b16 %v56
    %v65 = vunpack.c.l.b16 %v57
    %v66 = vunpack.c.l.b16 %v58
    %v67 = vpack.c.b16 %v64, %v63
    %v68 = vpack.c.b16 %v66, %v65
    %vm71 = vcmask 261120
    %v73 = vsel %vm71, %v54, 0
    %75 = vmatprep.subr.bf16.mxu0 0
    %76 = vmatpush1.bf16.msra.mxu0 %v67
    %77 = vmatprep.subr.bf16.mxu0 0
    %78 = vmatpush1.bf16.msra.mxu0 %v68
    %79 = vmatprep.subr.bf16.mxu0 0
    %80 = vmatpush1.bf16.msra.mxu0 0
    %81 = vmatprep.subr.bf16.mxu0 0
    %82 = vmatpush1.bf16.msra.mxu0 0
    %83 = vmatprep.subr.bf16.mxu0 0
    %84 = vmatpush1.bf16.msra.mxu0 0
    %85 = vmatprep.subr.bf16.mxu0 0
    %86 = vmatpush1.bf16.msra.mxu0 0
    %87 = vmatprep.subr.bf16.mxu0 0
    %88 = vmatpush1.bf16.msra.mxu0 0
    %89 = vmatprep.subr.bf16.mxu0 0
    %90 = vmatpush1.bf16.msra.mxu0 0
    %91 = vmatprep.subr.bf16.mxu0 0
    %92 = vmatpush1.bf16.msra.mxu0 0
    %93 = vmatprep.subr.bf16.mxu0 0
    %94 = vmatpush1.bf16.msra.mxu0 0
    %95 = vmatprep.subr.bf16.mxu0 0
    %96 = vmatpush1.bf16.msra.mxu0 0
    %97 = vmatprep.subr.bf16.mxu0 0
    %98 = vmatpush1.bf16.msra.mxu0 0
    %99 = vmatprep.subr.bf16.mxu0 0
    %100 = vmatpush1.bf16.msra.mxu0 0
    %101 = vmatprep.subr.bf16.mxu0 0
    %102 = vmatpush1.bf16.msra.mxu0 0
    %103 = vmatprep.subr.bf16.mxu0 0
    %104 = vmatpush1.bf16.msra.mxu0 0
    %105 = vmatprep.subr.bf16.mxu0 0
    %106 = vmatpush1.bf16.msra.mxu0 0
    %107 = vmatprep.mubr.bf16.mxu0 0
    %108 = vmatmul.mubr.bf16.gmra.mrb[0].mxu0 %v73
    %v109 = vpop.f32.mrb[0].mxu0
    %v110 = vadd.f32 0.0, %v109
    %v111 = vpop.f32.mrb[0].mxu0
    %v112 = vpop.f32.mrb[0].mxu0
    %v113 = vpop.f32.mrb[0].mxu0
    %114 = vdwg.mxu0
    %v115 = vadd.f32 %v53, %v110
    %116 = vst [vmem:[#allocation2] sm:$0xff] %v115
    // Predicated region
    $region34: #{tpu_custom_call.1} parent=1 // pred_check
      %p117 = pneg %p48
    $region35: #{tpu_custom_call.1} parent=1 // pred_check_branch
      %119 = sbr.rel (%p117) target = $region37
    $region36: #{tpu_custom_call.1} parent=1 // pred_region
      %v120 = vld [vmem:[#allocation2] sm:$0xff]
      %v121 = vrot.slane %v120, 4
      %v122 = vadd.f32 %v120, %v121
      %v123 = vrot.slane %v122, 2
      %v124 = vadd.f32 %v122, %v123
      %v125 = vrot.slane %v124, 1
      %v126 = vadd.f32 %v124, %v125
      %v127 = vmul.f32 %v126, 0.125
      %v128 = vsub.f32 %v120, %v127
      %v129 = vmul.f32 %v128, %v128
      %v130 = vrot.slane %v129, 4
      %v131 = vadd.f32 %v129, %v130
      %v132 = vrot.slane %v131, 2
      %v133 = vadd.f32 %v131, %v132
      %v134 = vrot.slane %v133, 1
      %v135 = vadd.f32 %v133, %v134
      %v136 = vmul.f32 %v135, 0.125
      %v137 = vld [vmem:[%s2] sm:$0x1]
      %v138 = vadd.f32 %v136, 1e-05
      %v139 = vrsqrt.pop %v138
      %v140 = vmul.f32 %v137, %v139
      %v142 = vlaneseq
      %v143 = vshrl.u32 %v142, 7
      %v144 = vsub.s32 0, %v143
      %v145 = vrot.slane %v140, %v144
      %v147 = vmul.f32 %v128, %v145
      %v148 = vld [vmem:[%s3] sm:$0x1]
      %v150 = vlaneseq
      %v151 = vshrl.u32 %v150, 7
      %v152 = vsub.s32 0, %v151
      %v153 = vrot.slane %v148, %v152
      %v155 = vadd.f32 %v147, %v153
      %v156 = vmax.f32 %v155, 0.0
      %v157 = vld [vmem:[%s4] sm:$0x3]
      %v158 = vunpack.c.0.s8 %v157
      %v159 = vand.u32 %v158, 255
      %vm160 = vcmp.lt.s32.totalorder %v159, 128
      %v161 = vmul.f32 %v156, 2.0
      %v162 = vsel %vm160, %v161, 0.0
      %163 = vst [vmem:[#allocation8] sm:$0xff] %v162
    $region37: #{tpu_custom_call.1} parent=1 // pred_fallthru
      _
    // Predicated region
    $region38: #{tpu_custom_call.1} parent=1 // pred_check
      _
    $region39: #{tpu_custom_call.1} parent=1 // pred_check_branch
      %165 = sbr.rel (0) target = $region41
    $region40: #{tpu_custom_call.1} parent=1 // pred_region
      %s167 = ssub.s32 128, 128
      %168 = vsyncadd [#allocation5], %s167
      %s170 = sshll.u32 [#allocation8], 4
      %s171 = int_to_ptr.vmem [resolvable:$true] %s170
      %173 = dma.vmem_to_hbm [thread:$0]  %s171, 128, %s5, [#allocation5]
    $region41: #{tpu_custom_call.1} parent=1 // pred_fallthru
      _
    // Predicated region
    $region42: #{tpu_custom_call.1} parent=1 // pred_check
      _
    $region43: #{tpu_custom_call.1} parent=1 // pred_check_branch
      %175 = sbr.rel (0) target = $region45
    $region44: #{tpu_custom_call.1} parent=1 // pred_region
      %176 = dma.done [#allocation5], 128
    $region45: #{tpu_custom_call.1} parent=1 // pred_fallthru
      _
    %177 = vsyncpa [#allocation4], 1
    %178 = vsyncpa [#allocation7], 1
    %179 = vsyncpa [#allocation5], 1

</llo_original>
